<compile_context>
chip_gen: v6e
topology: v6e:2x2x1
jax: 0.10.0
libtpu: 0.0.40
codegen_flags: <defaults>
</compile_context>

<pallas_src>
import functools

import jax
import jax.numpy as jnp
from jax.experimental import pallas as pl
from jax.experimental.pallas import tpu as pltpu


def _round_up(x, m):
    return ((x + m - 1) // m) * m


# ----------------------------------------------------------------------------
# Pallas kernel: one (batch, pixel-tile) grid step of the fused 1x1 conv + bias
# ----------------------------------------------------------------------------
def _conv1x1_kernel(x_ref, w_ref, b_ref, o_ref, *, cin, use_mxu):
    """x_ref: (Cin, T) pixels-on-lanes, w_ref: (Cout, Cin), b_ref: (Cout, 1),
    o_ref: (Cout, T) lane-dense output tile."""
    bf = b_ref[...].astype(jnp.float32)                        # (Cout, 1)
    if use_mxu:
        # MXU path for larger channel counts; f32 accumulation.
        y = jax.lax.dot_general(
            w_ref[...], x_ref[...],
            dimension_numbers=(((1,), (0,)), ((), ())),
            preferred_element_type=jnp.float32)                 # (Cout, T)
    else:
        # Tiny contraction (K = Cin <= 16): VPU broadcast-FMA over Cin keeps
        # everything lane-dense and skips the MXU push/pop path entirely.
        xf = x_ref[...].astype(jnp.float32)                     # (Cin, T)
        wf = w_ref[...].astype(jnp.float32)                     # (Cout, Cin)
        y = jnp.zeros(o_ref.shape, jnp.float32)
        for i in range(cin):
            y = y + wf[:, i:i + 1] * xf[i:i + 1, :]             # (Cout,1)*(1,T)
    o_ref[...] = (y + bf).astype(o_ref.dtype)


# ----------------------------------------------------------------------------
# Tile sizing: MiB-scale DMAs, VMEM-safe on every generation, >= ~4 grid steps
# ----------------------------------------------------------------------------
def _pick_hw_tile(hw, batch, cin, cout, x_bytes, o_bytes, *,
                  tile_budget_bytes=8 * 1024 * 1024, min_grid_steps=4):
    # VMEM bytes per pixel column: double-buffered input + output tiles.
    per_px = 2 * (cin * x_bytes + cout * o_bytes)
    t = (tile_budget_bytes // max(per_px, 1)) // 128 * 128
    t = max(t, 128)
    # Keep enough grid steps to feed v7x's two TensorCores (harmless on the
    # single-TC v5e/v6e), but never shrink below ~512 pixels just for that.
    t_cap = max(_round_up(pl.cdiv(hw * batch, min_grid_steps), 128), 512)
    t = min(t, t_cap)
    if t >= hw:
        return hw   # full spatial row: block dim == array dim, always legal
    return t        # multiple of 128; the ragged trailing block is masked


# ----------------------------------------------------------------------------
# Wrapper: outconv.forward
# ----------------------------------------------------------------------------
def conv1x1_nchw(x, weight, bias, *, t_hw=None, compute_dtype=None):
    """y = Conv2d(in_ch, out_ch, kernel_size=1)(x)

    x:      (B, Cin, H, W)    activations, PyTorch NCHW layout
    weight: (Cout, Cin, 1, 1) PyTorch Conv2d weight
    bias:   (Cout,)           PyTorch Conv2d bias
    returns (B, Cout, H, W) with x.dtype.
    """
    B, Cin, H, W = x.shape
    Cout = weight.shape[0]
    HW = H * W
    out_dtype = x.dtype

    w2 = weight.reshape(Cout, Cin)
    b2 = bias.reshape(Cout, 1)
    x3 = x.reshape(B, Cin, HW)          # free: NCHW is already (B, Cin, H*W)

    # Optional reduced-precision compute (halves HBM read traffic when the
    # cast fuses into x's producer); accumulation stays f32 either way.
    if compute_dtype is not None and compute_dtype != x3.dtype:
        x3 = x3.astype(compute_dtype)
        w2 = w2.astype(compute_dtype)

    if t_hw is None:
        t_hw = _pick_hw_tile(HW, B, Cin, Cout,
                             x3.dtype.itemsize,
                             jnp.dtype(out_dtype).itemsize)
    n_hw = pl.cdiv(HW, t_hw)

    use_mxu = Cin > 16
    kernel = functools.partial(_conv1x1_kernel, cin=Cin, use_mxu=use_mxu)

    flops = 2 * B * HW * Cin * Cout
    bytes_accessed = (x3.size * x3.dtype.itemsize
                      + B * Cout * HW * jnp.dtype(out_dtype).itemsize
                      + w2.size * w2.dtype.itemsize
                      + b2.size * b2.dtype.itemsize)

    out = pl.pallas_call(
        kernel,
        out_shape=jax.ShapeDtypeStruct((B, Cout, HW), out_dtype),
        grid=(B, n_hw),
        in_specs=[
            # streamed pixel tile: auto double-buffered by BlockSpec
            pl.BlockSpec((pl.Squeezed(), Cin, t_hw), lambda b, t: (b, 0, t)),
            # weight + bias: constant index_map -> VMEM-resident across grid
            # TODO(synk): for very large Cin*Cout on v5e, pass
            # pipeline_mode=pl.Buffered(1) here so the weight is not
            # double-buffered against the 16 MiB scoped-VMEM default.
            pl.BlockSpec((Cout, Cin), lambda b, t: (0, 0)),
            pl.BlockSpec((Cout, 1), lambda b, t: (0, 0)),
        ],
        out_specs=pl.BlockSpec((pl.Squeezed(), Cout, t_hw),
                               lambda b, t: (b, 0, t)),
        compiler_params=pltpu.CompilerParams(
            dimension_semantics=("parallel", "parallel"),
            vmem_limit_bytes=32 * 1024 * 1024),
        cost_estimate=pl.CostEstimate(flops=flops, transcendentals=0,
                                      bytes_accessed=bytes_accessed),
    )(x3, w2, b2)

    return out.reshape(B, Cout, H, W)


# ----------------------------------------------------------------------------
if __name__ == "__main__":
    key = jax.random.PRNGKey(0)
    kx, kw, kb = jax.random.split(key, 3)

    # Small shapes consistent with the module: B=2, in_ch=4, out_ch=8, 16x16.
    B, Cin, Cout, H, W = 2, 4, 8, 16, 16
    x = jax.random.normal(kx, (B, Cin, H, W), jnp.float32)

    # PyTorch-shaped Conv2d parameters (used as-is by the wrapper).
    w_torch = 0.1 * jax.random.normal(kw, (Cout, Cin, 1, 1), jnp.float32)
    b_torch = 0.05 * jax.random.normal(kb, (Cout,), jnp.float32)

    fwd = jax.jit(functools.partial(conv1x1_nchw, weight=w_torch, bias=b_torch))
    y = fwd(x)
    jax.block_until_ready(y)

    # Reference (plain XLA) check of the 1x1-conv semantics.
    y_ref = (jnp.einsum("bihw,oi->bohw", x, w_torch.reshape(Cout, Cin))
             + b_torch.reshape(1, Cout, 1, 1))
    assert y.shape == (B, Cout, H, W)
    assert jnp.allclose(y, y_ref, atol=1e-5, rtol=1e-5)

    print("KERNEL_OK")
</pallas_src>

<mosaic_0001>
module attributes {stable_mosaic.version = 11 : i64} {
  func.func @_conv1x1_kernel(%arg0: i32, %arg1: i32, %arg2: memref<1x4x256xf32, #tpu.memory_space<vmem>>, %arg3: memref<8x4xf32, #tpu.memory_space<vmem>>, %arg4: memref<8x1xf32, #tpu.memory_space<vmem>>, %arg5: memref<1x8x256xf32, #tpu.memory_space<vmem>>) attributes {dimension_semantics = [#tpu.dimension_semantics<parallel>, #tpu.dimension_semantics<parallel>], iteration_bounds = array<i64: 2, 1>, scalar_prefetch = 0 : i64, scratch_operands = 0 : i64, tpu.core_type = #tpu.core_type<tc>, window_params = [{transform_indices = @transform_0, window_bounds = array<i64: 1, 4, 256>}, {pipeline_mode = #tpu.pipeline_mode<synchronous>, transform_indices = @transform_1, window_bounds = array<i64: 8, 4>}, {pipeline_mode = #tpu.pipeline_mode<synchronous>, transform_indices = @transform_2, window_bounds = array<i64: 8, 1>}, {transform_indices = @transform_3, window_bounds = array<i64: 1, 8, 256>}]} {
    %c0 = arith.constant 0 : index
    %c0_0 = arith.constant 0 : index
    %0 = vector.load %arg4[%c0, %c0_0] : memref<8x1xf32, #tpu.memory_space<vmem>>, vector<8x1xf32>
    %c0_1 = arith.constant 0 : index
    %c0_2 = arith.constant 0 : index
    %c0_3 = arith.constant 0 : index
    %1 = vector.load %arg2[%c0_1, %c0_2, %c0_3] : memref<1x4x256xf32, #tpu.memory_space<vmem>>, vector<1x4x256xf32>
    %2 = vector.shape_cast %1 : vector<1x4x256xf32> to vector<4x256xf32>
    %c0_4 = arith.constant 0 : index
    %c0_5 = arith.constant 0 : index
    %3 = vector.load %arg3[%c0_4, %c0_5] : memref<8x4xf32, #tpu.memory_space<vmem>>, vector<8x4xf32>
    %cst = arith.constant 0.000000e+00 : f32
    %4 = vector.broadcast %cst : f32 to vector<8x256xf32>
    %5 = vector.extract_strided_slice %3 {offsets = [0, 0], sizes = [8, 1], strides = [1, 1]} : vector<8x4xf32> to vector<8x1xf32>
    %6 = vector.extract_strided_slice %2 {offsets = [0, 0], sizes = [1, 256], strides = [1, 1]} : vector<4x256xf32> to vector<1x256xf32>
    %7 = vector.broadcast %5 : vector<8x1xf32> to vector<8x256xf32>
    %8 = vector.broadcast %6 : vector<1x256xf32> to vector<8x256xf32>
    %9 = arith.mulf %7, %8 : vector<8x256xf32>
    %10 = arith.addf %4, %9 : vector<8x256xf32>
    %11 = vector.extract_strided_slice %3 {offsets = [0, 1], sizes = [8, 1], strides = [1, 1]} : vector<8x4xf32> to vector<8x1xf32>
    %12 = vector.extract_strided_slice %2 {offsets = [1, 0], sizes = [1, 256], strides = [1, 1]} : vector<4x256xf32> to vector<1x256xf32>
    %13 = vector.broadcast %11 : vector<8x1xf32> to vector<8x256xf32>
    %14 = vector.broadcast %12 : vector<1x256xf32> to vector<8x256xf32>
    %15 = arith.mulf %13, %14 : vector<8x256xf32>
    %16 = arith.addf %10, %15 : vector<8x256xf32>
    %17 = vector.extract_strided_slice %3 {offsets = [0, 2], sizes = [8, 1], strides = [1, 1]} : vector<8x4xf32> to vector<8x1xf32>
    %18 = vector.extract_strided_slice %2 {offsets = [2, 0], sizes = [1, 256], strides = [1, 1]} : vector<4x256xf32> to vector<1x256xf32>
    %19 = vector.broadcast %17 : vector<8x1xf32> to vector<8x256xf32>
    %20 = vector.broadcast %18 : vector<1x256xf32> to vector<8x256xf32>
    %21 = arith.mulf %19, %20 : vector<8x256xf32>
    %22 = arith.addf %16, %21 : vector<8x256xf32>
    %23 = vector.extract_strided_slice %3 {offsets = [0, 3], sizes = [8, 1], strides = [1, 1]} : vector<8x4xf32> to vector<8x1xf32>
    %24 = vector.extract_strided_slice %2 {offsets = [3, 0], sizes = [1, 256], strides = [1, 1]} : vector<4x256xf32> to vector<1x256xf32>
    %25 = vector.broadcast %23 : vector<8x1xf32> to vector<8x256xf32>
    %26 = vector.broadcast %24 : vector<1x256xf32> to vector<8x256xf32>
    %27 = arith.mulf %25, %26 : vector<8x256xf32>
    %28 = arith.addf %22, %27 : vector<8x256xf32>
    %29 = vector.broadcast %0 : vector<8x1xf32> to vector<8x256xf32>
    %30 = arith.addf %28, %29 : vector<8x256xf32>
    %c0_6 = arith.constant 0 : index
    %c0_7 = arith.constant 0 : index
    %c0_8 = arith.constant 0 : index
    %31 = vector.load %arg5[%c0_6, %c0_7, %c0_8] : memref<1x8x256xf32, #tpu.memory_space<vmem>>, vector<1x8x256xf32>
    %32 = vector.shape_cast %31 : vector<1x8x256xf32> to vector<8x256xf32>
    %33 = vector.shape_cast %30 : vector<8x256xf32> to vector<1x8x256xf32>
    tpu.vector_store %arg5[%c0_6, %c0_7, %c0_8], %33 {strides = array<i32>} : memref<1x8x256xf32, #tpu.memory_space<vmem>>, vector<1x8x256xf32>,
    return
  }
  func.func @transform_0(%arg0: i32, %arg1: i32) -> (i32, i32, i32) {
    %c0_i32 = arith.constant 0 : i32
    %c0_i32_0 = arith.constant 0 : i32
    return %arg0, %c0_i32, %arg1 : i32, i32, i32
  }
  func.func @transform_1(%arg0: i32, %arg1: i32) -> (i32, i32) {
    %c0_i32 = arith.constant 0 : i32
    %c0_i32_0 = arith.constant 0 : i32
    %c0_i32_1 = arith.constant 0 : i32
    return %c0_i32, %c0_i32_0 : i32, i32
  }
  func.func @transform_2(%arg0: i32, %arg1: i32) -> (i32, i32) {
    %c0_i32 = arith.constant 0 : i32
    %c0_i32_0 = arith.constant 0 : i32
    %c0_i32_1 = arith.constant 0 : i32
    return %c0_i32, %c0_i32_0 : i32, i32
  }
  func.func @transform_3(%arg0: i32, %arg1: i32) -> (i32, i32, i32) {
    %c0_i32 = arith.constant 0 : i32
    %c0_i32_0 = arith.constant 0 : i32
    return %arg0, %c0_i32, %arg1 : i32, i32, i32
  }
}

</mosaic_0001>

<llo_original>
// kernel: conv1x1_nchw.1
$region0: #{conv1x1_nchw.1}
  #allocation0 [shape = 'u32[]', space=smem, size = 0x4, offset = 0x4, fixed_abs, tag = 'smem constant byte address 0x4 - core index']
  #allocation1 [shape = 'u32[144,128]{1,0:T(1,128)}', space=vmem, size = 0x12000, scoped, tag = 'internal scratch']
  %s0 = inlined_call_operand.vmem [shape: f32[2,4,256], index: 0, kind: input, shape index: {}]
  %s1 = inlined_call_operand.vmem [shape: f32[8,4], index: 1, kind: input, shape index: {}]
  %s2 = inlined_call_operand.vmem [shape: f32[8,1], index: 2, kind: input, shape index: {}]
  %s3 = inlined_call_operand.vmem [shape: f32[2,8,256], index: 3, kind: output, shape index: {}]
  %s4 = sld [smem:[#allocation0]]
  $region45: #{conv1x1_nchw.1} parent=0
    _
  %s6 = ssub.s32 1, %s4
  %s7 = scalar_select 0, %s6, %s4
  loop: start=0, step=1, limit=4
  $region2: #{conv1x1_nchw.1} parent=0 // loop_pre_header
    _
  $region3: #{conv1x1_nchw.1} parent=0 // loop_header
    %s9 = sphi 0, %s13
    %p10 = scmp.ge.s32.totalorder %s9, 4
    %s16 = sphi 0, %s28
    %s17 = sphi 0, %s24
    %s18 = sphi 0, %s16
    %s19 = sphi 0, %s17
    %s20 = sphi 0, %s18
    %s21 = sphi 0, %s19
    %s33 = sphi 0, %s35
    %s36 = sphi 0, %s33
    %s37 = sphi 0, %s36
    %s53 = sphi 0, %s37
    %s57 = sphi 0, %s57
    %s59 = sphi 0, %s57
    %s60 = sphi 0, %s59
    %s74 = sphi 0, %s60
    %s78 = sphi 0, %s78
    %s80 = sphi 0, %s78
    %s81 = sphi 0, %s80
    %s95 = sphi 0, %s81
    %s103 = sphi 0, %s105
    %s106 = sphi 0, %s103
    %s107 = sphi 0, %s106
    %s123 = sphi 0, %s107
  $region4: #{conv1x1_nchw.1} parent=0 // loop_header_branch
    %12 = sbr.rel (%p10) target = $region8
  $region5: #{conv1x1_nchw.1} parent=0 // loop_body
    %s14 = ssub.s32 %s9, 1
    %s15 = ssub.s32 %s9, 2
    %s22 = sadd.s32 1, %s17
    %p23 = scmp.ge.s32.totalorder %s22, 1
    %s24 = scalar_select %p23, 0, %s22
    %s25 = sadd.s32 1, %s16
    %s26 = scalar_select %p23, %s25, %s16
    %p27 = scmp.ge.s32.totalorder %s26, 2
    %s28 = scalar_select %p27, 0, %s26
    %s29 = ssub.s32 %s16, %s28
    %s30 = ssub.s32 %s17, %s24
    %s31 = sor.u32 %s29, %s30
    %p32 = scmp.eq.s32.totalorder %s31, 0
    %s34 = sadd.s32 %s33, 1
    %s35 = scalar_select %p32, %s33, %s34
    %p38 = pneg %p32
    %p39 = scmp.eq.s32.totalorder %s9, 1
    %p40 = por %p38, %p39
    %p41 = scmp.ne.s32.totalorder %s33, %s36
    %p42 = scmp.eq.s32.totalorder %s9, 0
    %p43 = por %p41, %p42
    %p44 = scmp.ne.s32.totalorder %s33, %s36
    %p45 = scmp.eq.s32.totalorder %s14, 1
    %p46 = por %p44, %p45
    %p47 = scmp.ne.s32.totalorder %s36, %s37
    %p48 = scmp.eq.s32.totalorder %s14, 0
    %p49 = por %p47, %p48
    %p50 = scmp.ne.s32.totalorder %s36, %s37
    %p51 = scmp.eq.s32.totalorder %s15, 1
    %p52 = por %p50, %p51
    %p54 = scmp.ne.s32.totalorder %s37, %s53
    %p55 = scmp.eq.s32.totalorder %s15, 0
    %p56 = por %p54, %p55
    %s58 = sadd.s32 %s57, 1
    %p61 = scmp.eq.s32.totalorder %s9, 1
    %p62 = scmp.ne.s32.totalorder %s57, %s59
    %p63 = scmp.eq.s32.totalorder %s9, 0
    %p64 = por %p62, %p63
    %p65 = scmp.ne.s32.totalorder %s57, %s59
    %p66 = scmp.eq.s32.totalorder %s14, 1
    %p67 = por %p65, %p66
    %p68 = scmp.ne.s32.totalorder %s59, %s60
    %p69 = scmp.eq.s32.totalorder %s14, 0
    %p70 = por %p68, %p69
    %p71 = scmp.ne.s32.totalorder %s59, %s60
    %p72 = scmp.eq.s32.totalorder %s15, 1
    %p73 = por %p71, %p72
    %p75 = scmp.ne.s32.totalorder %s60, %s74
    %p76 = scmp.eq.s32.totalorder %s15, 0
    %p77 = por %p75, %p76
    %s79 = sadd.s32 %s78, 1
    %p82 = scmp.eq.s32.totalorder %s9, 1
    %p83 = scmp.ne.s32.totalorder %s78, %s80
    %p84 = scmp.eq.s32.totalorder %s9, 0
    %p85 = por %p83, %p84
    %p86 = scmp.ne.s32.totalorder %s78, %s80
    %p87 = scmp.eq.s32.totalorder %s14, 1
    %p88 = por %p86, %p87
    %p89 = scmp.ne.s32.totalorder %s80, %s81
    %p90 = scmp.eq.s32.totalorder %s14, 0
    %p91 = por %p89, %p90
    %p92 = scmp.ne.s32.totalorder %s80, %s81
    %p93 = scmp.eq.s32.totalorder %s15, 1
    %p94 = por %p92, %p93
    %p96 = scmp.ne.s32.totalorder %s81, %s95
    %p97 = scmp.eq.s32.totalorder %s15, 0
    %p98 = por %p96, %p97
    %s99 = ssub.s32 %s16, %s28
    %s100 = ssub.s32 %s17, %s24
    %s101 = sor.u32 %s99, %s100
    %p102 = scmp.eq.s32.totalorder %s101, 0
    %s104 = sadd.s32 %s103, 1
    %s105 = scalar_select %p102, %s103, %s104
    %p108 = pneg %p102
    %p109 = scmp.eq.s32.totalorder %s9, 1
    %p110 = por %p108, %p109
    %p111 = scmp.ne.s32.totalorder %s103, %s106
    %p112 = scmp.eq.s32.totalorder %s9, 0
    %p113 = por %p111, %p112
    %p114 = scmp.ne.s32.totalorder %s103, %s106
    %p115 = scmp.eq.s32.totalorder %s14, 1
    %p116 = por %p114, %p115
    %p117 = scmp.ne.s32.totalorder %s106, %s107
    %p118 = scmp.eq.s32.totalorder %s14, 0
    %p119 = por %p117, %p118
    %p120 = scmp.ne.s32.totalorder %s106, %s107
    %p121 = scmp.eq.s32.totalorder %s15, 1
    %p122 = por %p120, %p121
    %p124 = scmp.ne.s32.totalorder %s107, %s123
    %p125 = scmp.eq.s32.totalorder %s15, 0
    %p126 = por %p124, %p125
    %p127 = scmp.le.s32.totalorder 1, %s9
    %p128 = scmp.lt.s32.totalorder %s9, 3
    %p129 = pnand %p127, %p128
    %p130 = pneg %p129
    // Predicated region
    $region9: #{conv1x1_nchw.1} parent=5 // pred_check
      _
    $region10: #{conv1x1_nchw.1} parent=5 // pred_check_branch
      %132 = sbr.rel (%p129) target = $region12
    $region11: #{conv1x1_nchw.1} parent=5 // pred_region
      %s133 = ssub.s32 %s9, 1
      // Predicated region
      $region13: #{conv1x1_nchw.1} parent=11 // pred_check
        %p134 = pneg %p70
      $region14: #{conv1x1_nchw.1} parent=11 // pred_check_branch
        %136 = sbr.rel (%p134) target = $region16
      $region15: #{conv1x1_nchw.1} parent=11 // pred_region
        _
      $region16: #{conv1x1_nchw.1} parent=11 // pred_fallthru
        _
      // Predicated region
      $region17: #{conv1x1_nchw.1} parent=11 // pred_check
        %p137 = pneg %p91
      $region18: #{conv1x1_nchw.1} parent=11 // pred_check_branch
        %139 = sbr.rel (%p137) target = $region20
      $region19: #{conv1x1_nchw.1} parent=11 // pred_region
        _
      $region20: #{conv1x1_nchw.1} parent=11 // pred_fallthru
        _
    $region12: #{conv1x1_nchw.1} parent=5 // pred_fallthru
      _
    %p140 = scmp.lt.s32.totalorder %s9, 2
    // Predicated region
    $region21: #{conv1x1_nchw.1} parent=5 // pred_check
      %p141 = pneg %p140
    $region22: #{conv1x1_nchw.1} parent=5 // pred_check_branch
      %143 = sbr.rel (%p141) target = $region24
    $region23: #{conv1x1_nchw.1} parent=5 // pred_region
      // Predicated region
      $region25: #{conv1x1_nchw.1} parent=23 // pred_check
        %p144 = pneg %p43
      $region26: #{conv1x1_nchw.1} parent=23 // pred_check_branch
        %146 = sbr.rel (%p144) target = $region28
      $region27: #{conv1x1_nchw.1} parent=23 // pred_region
        %s147 = smul.u32 2, %s17
        %p148 = scmp.lt.s32.totalorder %s16, 1
        %s149 = scalar_select %p148, %s16, 1
        %p150 = scmp.lt.s32.totalorder %s147, 1
        %s151 = scalar_select %p150, %s147, 1
        %s152 = smul.addr %s149, 2
        %s153 = sadd.s32 %s151, %s152
        %s154 = smul.addr %s153, 4
        %s155 = scalar_lea.vmem %s0, %s154
        %s156 = smul.u32 2, %s17
      $region28: #{conv1x1_nchw.1} parent=23 // pred_fallthru
        _
    $region24: #{conv1x1_nchw.1} parent=5 // pred_fallthru
      _
    %p157 = scmp.le.s32.totalorder 1, %s9
    %p158 = scmp.lt.s32.totalorder %s9, 3
    %p159 = pnand %p157, %p158
    %p160 = pneg %p159
    // Predicated region
    $region29: #{conv1x1_nchw.1} parent=5 // pred_check
      _
    $region30: #{conv1x1_nchw.1} parent=5 // pred_check_branch
      %162 = sbr.rel (%p159) target = $region32
    $region31: #{conv1x1_nchw.1} parent=5 // pred_region
      %s163 = ssub.s32 %s9, 1
      %s164 = smul.u32 2, %s19
      %p165 = scmp.lt.s32.totalorder %s18, 1
      %s166 = scalar_select %p165, %s18, 1
      %p167 = scmp.lt.s32.totalorder %s164, 1
      %s168 = scalar_select %p167, %s164, 1
      %s169 = smul.addr %s166, 2
      %s170 = sadd.s32 %s168, %s169
      %s171 = smul.addr %s170, 4
      %s172 = scalar_lea.vmem %s0, %s171
      %p173 = pneg %p49
      %p174 = pneg %p46
      %p175 = pneg %p70
      %p176 = pneg %p67
      %p177 = pneg %p91
      %p178 = pneg %p88
      %p179 = pneg %p119
      %p180 = pneg %p116
      %s181 = smul.u32 2, %s19
      %p182 = scmp.lt.s32.totalorder %s18, 1
      %s183 = scalar_select %p182, %s18, 1
      %p184 = scmp.lt.s32.totalorder %s181, 1
      %s185 = scalar_select %p184, %s181, 1
      %s186 = smul.addr %s183, 2
      %s187 = sadd.s32 %s185, %s186
      %s188 = smul.addr %s187, 8
      %s189 = scalar_lea.vmem %s3, %s188
      %s190 = smul.u32 2, %s19
      %p191 = scmp.lt.s32.totalorder %s18, 1
      %s192 = scalar_select %p191, %s18, 1
      %p193 = scmp.lt.s32.totalorder %s190, 1
      %s194 = scalar_select %p193, %s190, 1
      %s195 = smul.addr %s192, 2
      %s196 = sadd.s32 %s194, %s195
      %s197 = smul.addr %s196, 4
      %s198 = scalar_lea.vmem %s0, %s197
      %s199 = smul.u32 2, %s19
      %s200 = smul.u32 2, %s19
      %p201 = scmp.lt.s32.totalorder %s18, 1
      %s202 = scalar_select %p201, %s18, 1
      %p203 = scmp.lt.s32.totalorder %s200, 1
      %s204 = scalar_select %p203, %s200, 1
      %s205 = smul.addr %s202, 2
      %s206 = sadd.s32 %s204, %s205
      %s207 = smul.addr %s206, 8
      %s208 = scalar_lea.vmem %s3, %s207
      %s209 = smul.u32 2, %s19
      %v210 = vld [vmem:[%s2] sm:$0xff]
      %v211 = vld [vmem:[%s198] sm:$0xff]
      %v212 = vld [vmem:[%s1] sm:$0xff]
      %214 = vset.pattern.permute.xlu0 0
      %215 = vperm.xlu0 %214, %v212
      %v216 = vpop.permute.xlu0 %215
      %v219 = vlaneseq
      %v220 = vshrl.u32 %v219, 7
      %v221 = vsub.s32 0, %v220
      %v222 = vrot.slane %v211, %v221
      %v223 = vlaneseq
      %v224 = vshrl.u32 %v223, 7
      %v225 = vsub.s32 4, %v224
      %v226 = vrot.slane %v211, %v225
      %v229 = vlaneseq
      %v230 = vshrl.u32 %v229, 7
      %v231 = vsub.s32 0, %v230
      %v232 = vrot.slane %v222, %v231
      %v233 = vlaneseq
      %v234 = vshrl.u32 %v233, 7
      %v235 = vsub.s32 0, %v234
      %v236 = vrot.slane %v226, %v235
      %v237 = vmul.f32 %v216, %v232
      %v238 = vmul.f32 %v216, %v236
      %v239 = vadd.f32 %v237, 0.0
      %v240 = vadd.f32 %v238, 0.0
      %241 = vset.pattern.permute.xlu0 1
      %242 = vperm.xlu0 %241, %v212
      %v243 = vpop.permute.xlu0 %242
      %v245 = vlaneseq
      %v246 = vshrl.u32 %v245, 7
      %v247 = vsub.s32 1, %v246
      %v248 = vrot.slane %v211, %v247
      %v249 = vlaneseq
      %v250 = vshrl.u32 %v249, 7
      %v251 = vsub.s32 5, %v250
      %v252 = vrot.slane %v211, %v251
      %v255 = vlaneseq
      %v256 = vshrl.u32 %v255, 7
      %v257 = vsub.s32 1, %v256
      %v258 = vrot.slane %v248, %v257
      %v259 = vlaneseq
      %v260 = vshrl.u32 %v259, 7
      %v261 = vsub.s32 1, %v260
      %v262 = vrot.slane %v252, %v261
      %v263 = vmul.f32 %v243, %v258
      %v264 = vmul.f32 %v243, %v262
      %v265 = vadd.f32 %v239, %v263
      %v266 = vadd.f32 %v240, %v264
      %267 = vset.pattern.permute.xlu0 2
      %268 = vperm.xlu0 %267, %v212
      %v269 = vpop.permute.xlu0 %268
      %v271 = vlaneseq
      %v272 = vshrl.u32 %v271, 7
      %v273 = vsub.s32 2, %v272
      %v274 = vrot.slane %v211, %v273
      %v275 = vlaneseq
      %v276 = vshrl.u32 %v275, 7
      %v277 = vsub.s32 6, %v276
      %v278 = vrot.slane %v211, %v277
      %v281 = vlaneseq
      %v282 = vshrl.u32 %v281, 7
      %v283 = vsub.s32 2, %v282
      %v284 = vrot.slane %v274, %v283
      %v285 = vlaneseq
      %v286 = vshrl.u32 %v285, 7
      %v287 = vsub.s32 2, %v286
      %v288 = vrot.slane %v278, %v287
      %v289 = vmul.f32 %v269, %v284
      %v290 = vmul.f32 %v269, %v288
      %v291 = vadd.f32 %v265, %v289
      %v292 = vadd.f32 %v266, %v290
      %293 = vset.pattern.permute.xlu0 3
      %294 = vperm.xlu0 %293, %v212
      %v295 = vpop.permute.xlu0 %294
      %v297 = vlaneseq
      %v298 = vshrl.u32 %v297, 7
      %v299 = vsub.s32 3, %v298
      %v300 = vrot.slane %v211, %v299
      %v301 = vlaneseq
      %v302 = vshrl.u32 %v301, 7
      %v303 = vsub.s32 7, %v302
      %v304 = vrot.slane %v211, %v303
      %v307 = vlaneseq
      %v308 = vshrl.u32 %v307, 7
      %v309 = vsub.s32 3, %v308
      %v310 = vrot.slane %v300, %v309
      %v311 = vlaneseq
      %v312 = vshrl.u32 %v311, 7
      %v313 = vsub.s32 3, %v312
      %v314 = vrot.slane %v304, %v313
      %v315 = vmul.f32 %v295, %v310
      %v316 = vmul.f32 %v295, %v314
      %v317 = vadd.f32 %v291, %v315
      %v318 = vadd.f32 %v292, %v316
      %320 = vset.pattern.permute.xlu0 0
      %321 = vperm.xlu0 %320, %v210
      %v322 = vpop.permute.xlu0 %321
      %v324 = vadd.f32 %v317, %v322
      %v325 = vadd.f32 %v318, %v322
      %326 = vst [vmem:[%s208] sm:$0xff] %v324
      %327 = vst [vmem:[%s208 + $0x8] sm:$0xff] %v325
      %s328 = smul.u32 2, %s19
      %p329 = scmp.lt.s32.totalorder %s18, 1
      %s330 = scalar_select %p329, %s18, 1
      %p331 = scmp.lt.s32.totalorder %s328, 1
      %s332 = scalar_select %p331, %s328, 1
      %s333 = smul.addr %s330, 2
      %s334 = sadd.s32 %s332, %s333
      %s335 = smul.addr %s334, 8
      %s336 = scalar_lea.vmem %s3, %s335
      // Predicated region
      $region33: #{conv1x1_nchw.1} parent=31 // pred_check
        %p337 = pneg %p116
      $region34: #{conv1x1_nchw.1} parent=31 // pred_check_branch
        %339 = sbr.rel (%p337) target = $region36
      $region35: #{conv1x1_nchw.1} parent=31 // pred_region
        %s340 = smul.u32 2, %s19
      $region36: #{conv1x1_nchw.1} parent=31 // pred_fallthru
        _
    $region32: #{conv1x1_nchw.1} parent=5 // pred_fallthru
      _
    %p341 = scmp.le.s32.totalorder 2, %s9
    // Predicated region
    $region37: #{conv1x1_nchw.1} parent=5 // pred_check
      %p342 = pneg %p341
    $region38: #{conv1x1_nchw.1} parent=5 // pred_check_branch
      %344 = sbr.rel (%p342) target = $region40
    $region39: #{conv1x1_nchw.1} parent=5 // pred_region
      %s345 = ssub.s32 %s9, 2
      // Predicated region
      $region41: #{conv1x1_nchw.1} parent=39 // pred_check
        %p346 = pneg %p122
      $region42: #{conv1x1_nchw.1} parent=39 // pred_check_branch
        %348 = sbr.rel (%p346) target = $region44
      $region43: #{conv1x1_nchw.1} parent=39 // pred_region
        %s349 = smul.u32 2, %s21
        %p350 = scmp.lt.s32.totalorder %s20, 1
        %s351 = scalar_select %p350, %s20, 1
        %p352 = scmp.lt.s32.totalorder %s349, 1
        %s353 = scalar_select %p352, %s349, 1
        %s354 = smul.addr %s351, 2
        %s355 = sadd.s32 %s353, %s354
        %s356 = smul.addr %s355, 8
        %s357 = scalar_lea.vmem %s3, %s356
      $region44: #{conv1x1_nchw.1} parent=39 // pred_fallthru
        _
    $region40: #{conv1x1_nchw.1} parent=5 // pred_fallthru
      _
  $region6: #{conv1x1_nchw.1} parent=0 // loop_footer
    %s13 = sadd.s32 1, %s9
  $region7: #{conv1x1_nchw.1} parent=0 // loop_footer_branch
    %8 = sbr.rel target = $region3
  $region8: #{conv1x1_nchw.1} parent=0 // loop_exit
    _

</llo_original>
